<compile_context>
chip_gen: v7x
topology: tpu7x:2x2x1
jax: 0.10.0
libtpu: 0.0.40
codegen_flags: <defaults>
</compile_context>

<pallas_src>
import math
import functools

import jax
import jax.numpy as jnp
from jax.experimental import pallas as pl
from jax.experimental.pallas import tpu as pltpu


def _bessel_fc_kernel(x_ref, w0_ref, w1s_ref, out_ref, basis_ref, *,
                      basis_size, factor, max_radius, epsilon, theta_scale):
    # x_ref:     (1, TN)   radii tile, batch on lanes
    # w0_ref:    (U, B)    first FC weight (torch out x in layout), resident
    # w1s_ref:   (U, U)    second FC weight pre-scaled by 1/sqrt(U), resident
    # out_ref:   (U, TN)   feature-major output tile (lane-dense stores)
    # basis_ref: (B, TN)   f32 VMEM scratch for the assembled basis
    x = x_ref[...]                                       # (1, TN) f32
    in_cutoff = jnp.logical_and(x >= 0.0, x <= max_radius)
    x_wc = jnp.where(in_cutoff, x, 0.0)                  # (1, TN)

    # One divide per radius (not per radius*basis); fold `factor` in here.
    inv = factor / (x_wc + epsilon)                      # (1, TN)

    # sin(k*theta) for k = 1..B via the multiple-angle recurrence
    #   sin((k+1)t) = 2*cos(t)*sin(k*t) - sin((k-1)*t)
    # -> 2 transcendentals per radius instead of B, rest is cheap VPU work.
    theta = x_wc * theta_scale                           # (1, TN)
    s_cur = jnp.sin(theta)
    two_c1 = 2.0 * jnp.cos(theta)
    s_prev = jnp.zeros_like(s_cur)                       # sin(0 * theta) == 0
    basis_ref[0:1, :] = s_cur * inv
    for k in range(1, basis_size):                       # static unroll, B small
        s_next = two_c1 * s_cur - s_prev
        basis_ref[k:k + 1, :] = s_next * inv
        s_prev, s_cur = s_cur, s_next

    md = w0_ref.dtype                                    # MXU input dtype
    basis = basis_ref[...].astype(md)                    # (B, TN)

    # FC layer 0: relu(W0 @ basis)  == relu(basis_rowmajor @ W0.T), transposed.
    h = jnp.dot(w0_ref[...], basis, preferred_element_type=jnp.float32)
    h = jnp.maximum(h, 0.0)                              # (U, TN) f32

    # FC layer 1: relu(W1s @ h), W1s already scaled by 1/sqrt(num_units_in).
    h = jnp.dot(w1s_ref[...], h.astype(md), preferred_element_type=jnp.float32)
    h = jnp.maximum(h, 0.0)

    out_ref[...] = h.astype(out_ref.dtype)               # lane-dense store


def bessel_radial_basis_ref(x, n_scaled, w0, w1, *, factor, max_radius,
                            epsilon, matmul_dtype=jnp.float32):
    """Pure-JAX mirror of the PyTorch forward.  matmul_dtype=bfloat16 mirrors
    the kernel's fast path (bf16 MXU inputs, f32 accumulate)."""
    md = jnp.dtype(matmul_dtype)
    x_wc = ((x >= 0.0) & (x <= max_radius)) * x
    x_wc = x_wc[:, None]
    basis = factor * jnp.sin(n_scaled * x_wc) / (x_wc + epsilon)
    num_units_in = w0.shape[0]
    w0t = w0.T.astype(md)
    w1t = (w1.T / math.sqrt(float(num_units_in))).astype(md)
    h = jnp.maximum(jnp.dot(basis.astype(md), w0t,
                            preferred_element_type=jnp.float32), 0.0)
    h = jnp.maximum(jnp.dot(h.astype(md), w1t,
                            preferred_element_type=jnp.float32), 0.0)
    return h


def bessel_radial_basis(x, w0, w1, *, basis_size, factor, max_radius,
                        epsilon=1e-8, tile_n=4096,
                        matmul_dtype=jnp.bfloat16, out_dtype=jnp.float32,
                        feature_major=False, min_pallas_n=512):
    """Bessel radial basis + 2-layer FC.

    x: (N,) radii.  Returns (N, U) (module convention) or, with
    feature_major=True, (U, N) -- which skips an extra full HBM pass over the
    (traffic-dominating) output and is the preferred form for fused consumers.
    """
    N = x.shape[0]
    U = w0.shape[0]
    assert w0.shape == (U, basis_size) and w1.shape == (U, U)

    if N <= min_pallas_n:
        # Small-N fast path: fixed pallas_call / DMA overhead dominates below a
        # few lane-dense tiles; plain XLA matches the reference exactly.
        n_scaled = (jnp.arange(1, basis_size + 1, dtype=jnp.float32)[None, :]
                    * (math.pi / max_radius))
        out = bessel_radial_basis_ref(
            x.astype(jnp.float32), n_scaled, w0.astype(jnp.float32),
            w1.astype(jnp.float32), factor=factor, max_radius=max_radius,
            epsilon=epsilon, matmul_dtype=matmul_dtype).astype(out_dtype)
        return out.T if feature_major else out

    # ---- lane-dense tiling of the radii batch ------------------------------
    # Pad N to a multiple of 128 lanes, then split into num_tiles equal
    # 128-multiple tiles: padding waste is bounded (<128 radii per tile, never
    # a fully-padded tile) and large N always gets >=2 tiles so ("parallel",)
    # can shard the grid across v7x's two TensorCores.
    n_pad128 = ((N + 127) // 128) * 128
    tile_cap = max(128, (int(tile_n) // 128) * 128)
    num_tiles = max(1, -(-n_pad128 // tile_cap))
    if n_pad128 >= 256:
        num_tiles = max(num_tiles, 2)
    tile = -(-n_pad128 // (num_tiles * 128)) * 128
    n_pad = num_tiles * tile

    x_f32 = x.astype(jnp.float32)
    if n_pad == N:
        x_row = x_f32.reshape(1, N)
    else:
        # Padded radii are 0 -> sin(0)=0 -> padded basis/output columns are 0.
        x_row = jnp.zeros((1, n_pad), jnp.float32).at[0, :N].set(x_f32)

    md = jnp.dtype(matmul_dtype)
    w0_md = w0.astype(md)                                         # (U, B)
    # Hoist the per-layer 1/sqrt(num_units_in) scale out of the grid loop.
    w1s_md = (w1.astype(jnp.float32) / math.sqrt(float(U))).astype(md)  # (U, U)

    kernel = functools.partial(
        _bessel_fc_kernel, basis_size=int(basis_size),
        factor=float(factor), max_radius=float(max_radius),
        epsilon=float(epsilon), theta_scale=float(math.pi / max_radius))

    out_fm = pl.pallas_call(
        kernel,
        out_shape=jax.ShapeDtypeStruct((U, n_pad), jnp.dtype(out_dtype)),
        grid_spec=pltpu.PrefetchScalarGridSpec(
            num_scalar_prefetch=0,
            grid=(num_tiles,),
            in_specs=[
                pl.BlockSpec((1, tile), lambda i: (0, i)),         # radii tile
                pl.BlockSpec((U, basis_size), lambda i: (0, 0)),   # W0 resident
                pl.BlockSpec((U, U), lambda i: (0, 0)),            # W1 pre-scaled
            ],
            out_specs=pl.BlockSpec((U, tile), lambda i: (0, i)),   # lane-dense
            scratch_shapes=[pltpu.VMEM((int(basis_size), tile), jnp.float32)],
        ),
        compiler_params=pltpu.CompilerParams(
            dimension_semantics=("parallel",)),
    )(x_row, w0_md, w1s_md)

    if n_pad != N:
        out_fm = out_fm[:, :N]
    if feature_major:
        return out_fm                    # (U, N): no extra HBM pass
    # Module-convention (N, U) layout: this transpose is a full extra HBM
    # read+write over the output -- prefer feature_major=True when possible.
    return out_fm.T


if __name__ == "__main__":
    # Module config (consistent with Bessel_RadialBasis.__init__)
    basis_size = 8
    max_radius = 2.0
    epsilon = 1e-8
    num_units = 32
    N = 1024   # large enough to exercise the multi-tile Pallas path

    key = jax.random.PRNGKey(0)
    kx, k0, k1 = jax.random.split(key, 3)

    # radii in roughly [-0.2, 2.4] so both cutoff branches are exercised
    x = jax.random.uniform(kx, (N,), dtype=jnp.float32,
                           minval=-0.2, maxval=max_radius + 0.4)
    # deterministic "torch.randn"-style FC weights, torch (out, in) layout
    w0 = jax.random.normal(k0, (num_units, basis_size), dtype=jnp.float32)
    w1 = jax.random.normal(k1, (num_units, num_units), dtype=jnp.float32)

    n_scaled = (jnp.linspace(1.0, basis_size, basis_size,
                             dtype=jnp.float32)[None, :] * math.pi / max_radius)
    factor = math.sqrt(2.0 / max_radius)

    ref32 = bessel_radial_basis_ref(x, n_scaled, w0, w1, factor=factor,
                                    max_radius=max_radius, epsilon=epsilon)

    # 1) Semantic check: f32 MXU path, feature-major output (no transpose pass).
    out_f32 = bessel_radial_basis(x, w0, w1, basis_size=basis_size,
                                  factor=factor, max_radius=max_radius,
                                  epsilon=epsilon, matmul_dtype=jnp.float32,
                                  feature_major=True)
    out_f32 = jax.block_until_ready(out_f32)
    assert out_f32.shape == (num_units, N)
    assert jnp.allclose(out_f32.T, ref32, atol=2e-2, rtol=2e-2), \
        "f32 kernel mismatch vs reference"

    # 2) Default fast path: bf16 MXU inputs; compare against a reference that
    #    applies the same bf16 casts (f32 accumulate).
    out_bf16 = bessel_radial_basis(x, w0, w1, basis_size=basis_size,
                                   factor=factor, max_radius=max_radius,
                                   epsilon=epsilon, feature_major=True)
    out_bf16 = jax.block_until_ready(out_bf16)
    ref_bf16 = bessel_radial_basis_ref(x, n_scaled, w0, w1, factor=factor,
                                       max_radius=max_radius, epsilon=epsilon,
                                       matmul_dtype=jnp.bfloat16)
    assert jnp.allclose(out_bf16.T, ref_bf16, atol=1.0, rtol=5e-2), \
        "bf16 kernel mismatch vs bf16 reference"

    # 3) Module-convention (N, U) output via the small-N fast path.
    out_small = bessel_radial_basis(x[:64], w0, w1, basis_size=basis_size,
                                    factor=factor, max_radius=max_radius,
                                    epsilon=epsilon, matmul_dtype=jnp.float32)
    out_small = jax.block_until_ready(out_small)
    assert out_small.shape == (64, num_units)
    assert jnp.allclose(out_small, ref32[:64], atol=1e-4, rtol=1e-4), \
        "small-N fast path mismatch"

    print("KERNEL_OK")
</pallas_src>

<mosaic_0001>
module attributes {stable_mosaic.version = 11 : i64} {
  func.func @_bessel_fc_kernel(%arg0: i32, %arg1: memref<1x512xf32, #tpu.memory_space<vmem>>, %arg2: memref<32x8xf32, #tpu.memory_space<vmem>>, %arg3: memref<32x32xf32, #tpu.memory_space<vmem>>, %arg4: memref<32x512xf32, #tpu.memory_space<vmem>>, %arg5: memref<8x512xf32, #tpu.memory_space<vmem>>) attributes {dimension_semantics = [#tpu.dimension_semantics<parallel>], iteration_bounds = array<i64: 2>, scalar_prefetch = 0 : i64, scratch_operands = 1 : i64, tpu.core_type = #tpu.core_type<tc>, window_params = [{transform_indices = @transform_0, window_bounds = array<i64: 1, 512>}, {pipeline_mode = #tpu.pipeline_mode<synchronous>, transform_indices = @transform_1, window_bounds = array<i64: 32, 8>}, {pipeline_mode = #tpu.pipeline_mode<synchronous>, transform_indices = @transform_2, window_bounds = array<i64: 32, 32>}, {transform_indices = @transform_3, window_bounds = array<i64: 32, 512>}]} {
    %c0 = arith.constant 0 : index
    %c0_0 = arith.constant 0 : index
    %0 = vector.load %arg1[%c0, %c0_0] : memref<1x512xf32, #tpu.memory_space<vmem>>, vector<1x512xf32>
    %cst = arith.constant 0.000000e+00 : f32
    %1 = vector.broadcast %cst : f32 to vector<1x512xf32>
    %2 = arith.cmpf oge, %0, %1 : vector<1x512xf32>
    %cst_1 = arith.constant 2.000000e+00 : f32
    %3 = vector.broadcast %cst_1 : f32 to vector<1x512xf32>
    %4 = arith.cmpf ole, %0, %3 : vector<1x512xf32>
    %5 = arith.andi %2, %4 : vector<1x512xi1>
    %cst_2 = arith.constant 0.000000e+00 : f32
    %6 = vector.broadcast %cst_2 : f32 to vector<1x512xf32>
    %7 = arith.select %5, %0, %6 : vector<1x512xi1>, vector<1x512xf32>
    %cst_3 = arith.constant 9.99999993E-9 : f32
    %8 = vector.broadcast %cst_3 : f32 to vector<1x512xf32>
    %9 = arith.addf %7, %8 : vector<1x512xf32>
    %cst_4 = arith.constant 1.000000e+00 : f32
    %10 = vector.broadcast %cst_4 : f32 to vector<1x512xf32>
    %11 = arith.divf %10, %9 : vector<1x512xf32>
    %cst_5 = arith.constant 1.57079637 : f32
    %12 = vector.broadcast %cst_5 : f32 to vector<1x512xf32>
    %13 = arith.mulf %7, %12 : vector<1x512xf32>
    %14 = math.sin %13 : vector<1x512xf32>
    %15 = math.cos %13 : vector<1x512xf32>
    %cst_6 = arith.constant 2.000000e+00 : f32
    %16 = vector.broadcast %cst_6 : f32 to vector<1x512xf32>
    %17 = arith.mulf %16, %15 : vector<1x512xf32>
    %cst_7 = arith.constant 0.000000e+00 : f32
    %18 = vector.broadcast %cst_7 : f32 to vector<1x512xf32>
    %19 = arith.mulf %14, %11 : vector<1x512xf32>
    %c0_8 = arith.constant 0 : index
    %c0_9 = arith.constant 0 : index
    %20 = vector.load %arg5[%c0_8, %c0_9] : memref<8x512xf32, #tpu.memory_space<vmem>>, vector<1x512xf32>
    tpu.vector_store %arg5[%c0_8, %c0_9], %19 {strides = array<i32>} : memref<8x512xf32, #tpu.memory_space<vmem>>, vector<1x512xf32>,
    %21 = arith.mulf %17, %14 : vector<1x512xf32>
    %22 = arith.subf %21, %18 : vector<1x512xf32>
    %23 = arith.mulf %22, %11 : vector<1x512xf32>
    %c1 = arith.constant 1 : index
    %c0_10 = arith.constant 0 : index
    %24 = vector.load %arg5[%c1, %c0_10] : memref<8x512xf32, #tpu.memory_space<vmem>>, vector<1x512xf32>
    tpu.vector_store %arg5[%c1, %c0_10], %23 {strides = array<i32>} : memref<8x512xf32, #tpu.memory_space<vmem>>, vector<1x512xf32>,
    %25 = arith.mulf %17, %22 : vector<1x512xf32>
    %26 = arith.subf %25, %14 : vector<1x512xf32>
    %27 = arith.mulf %26, %11 : vector<1x512xf32>
    %c2 = arith.constant 2 : index
    %c0_11 = arith.constant 0 : index
    %28 = vector.load %arg5[%c2, %c0_11] : memref<8x512xf32, #tpu.memory_space<vmem>>, vector<1x512xf32>
    tpu.vector_store %arg5[%c2, %c0_11], %27 {strides = array<i32>} : memref<8x512xf32, #tpu.memory_space<vmem>>, vector<1x512xf32>,
    %29 = arith.mulf %17, %26 : vector<1x512xf32>
    %30 = arith.subf %29, %22 : vector<1x512xf32>
    %31 = arith.mulf %30, %11 : vector<1x512xf32>
    %c3 = arith.constant 3 : index
    %c0_12 = arith.constant 0 : index
    %32 = vector.load %arg5[%c3, %c0_12] : memref<8x512xf32, #tpu.memory_space<vmem>>, vector<1x512xf32>
    tpu.vector_store %arg5[%c3, %c0_12], %31 {strides = array<i32>} : memref<8x512xf32, #tpu.memory_space<vmem>>, vector<1x512xf32>,
    %33 = arith.mulf %17, %30 : vector<1x512xf32>
    %34 = arith.subf %33, %26 : vector<1x512xf32>
    %35 = arith.mulf %34, %11 : vector<1x512xf32>
    %c4 = arith.constant 4 : index
    %c0_13 = arith.constant 0 : index
    %36 = vector.load %arg5[%c4, %c0_13] : memref<8x512xf32, #tpu.memory_space<vmem>>, vector<1x512xf32>
    tpu.vector_store %arg5[%c4, %c0_13], %35 {strides = array<i32>} : memref<8x512xf32, #tpu.memory_space<vmem>>, vector<1x512xf32>,
    %37 = arith.mulf %17, %34 : vector<1x512xf32>
    %38 = arith.subf %37, %30 : vector<1x512xf32>
    %39 = arith.mulf %38, %11 : vector<1x512xf32>
    %c5 = arith.constant 5 : index
    %c0_14 = arith.constant 0 : index
    %40 = vector.load %arg5[%c5, %c0_14] : memref<8x512xf32, #tpu.memory_space<vmem>>, vector<1x512xf32>
    tpu.vector_store %arg5[%c5, %c0_14], %39 {strides = array<i32>} : memref<8x512xf32, #tpu.memory_space<vmem>>, vector<1x512xf32>,
    %41 = arith.mulf %17, %38 : vector<1x512xf32>
    %42 = arith.subf %41, %34 : vector<1x512xf32>
    %43 = arith.mulf %42, %11 : vector<1x512xf32>
    %c6 = arith.constant 6 : index
    %c0_15 = arith.constant 0 : index
    %44 = vector.load %arg5[%c6, %c0_15] : memref<8x512xf32, #tpu.memory_space<vmem>>, vector<1x512xf32>
    tpu.vector_store %arg5[%c6, %c0_15], %43 {strides = array<i32>} : memref<8x512xf32, #tpu.memory_space<vmem>>, vector<1x512xf32>,
    %45 = arith.mulf %17, %42 : vector<1x512xf32>
    %46 = arith.subf %45, %38 : vector<1x512xf32>
    %47 = arith.mulf %46, %11 : vector<1x512xf32>
    %c7 = arith.constant 7 : index
    %c0_16 = arith.constant 0 : index
    %48 = vector.load %arg5[%c7, %c0_16] : memref<8x512xf32, #tpu.memory_space<vmem>>, vector<1x512xf32>
    tpu.vector_store %arg5[%c7, %c0_16], %47 {strides = array<i32>} : memref<8x512xf32, #tpu.memory_space<vmem>>, vector<1x512xf32>,
    %c0_17 = arith.constant 0 : index
    %c0_18 = arith.constant 0 : index
    %49 = vector.load %arg5[%c0_17, %c0_18] : memref<8x512xf32, #tpu.memory_space<vmem>>, vector<8x512xf32>
    %c0_19 = arith.constant 0 : index
    %c0_20 = arith.constant 0 : index
    %50 = vector.load %arg2[%c0_19, %c0_20] : memref<32x8xf32, #tpu.memory_space<vmem>>, vector<32x8xf32>
    %cst_21 = arith.constant dense<0.000000e+00> : vector<32x512xf32>
    %51 = tpu.matmul %50, %49, %cst_21 {dimension_numbers = #tpu.dot_dimension_numbers<[1], [0], [0], [1], [0, 0, 1, 1], [], []>} : vector<32x8xf32>, vector<8x512xf32>, vector<32x512xf32> -> vector<32x512xf32>
    %cst_22 = arith.constant 0.000000e+00 : f32
    %52 = vector.broadcast %cst_22 : f32 to vector<32x512xf32>
    %53 = arith.maximumf %51, %52 : vector<32x512xf32>
    %c0_23 = arith.constant 0 : index
    %c0_24 = arith.constant 0 : index
    %54 = vector.load %arg3[%c0_23, %c0_24] : memref<32x32xf32, #tpu.memory_space<vmem>>, vector<32x32xf32>
    %cst_25 = arith.constant dense<0.000000e+00> : vector<32x512xf32>
    %55 = tpu.matmul %54, %53, %cst_25 {dimension_numbers = #tpu.dot_dimension_numbers<[1], [0], [0], [1], [0, 0, 1, 1], [], []>} : vector<32x32xf32>, vector<32x512xf32>, vector<32x512xf32> -> vector<32x512xf32>
    %cst_26 = arith.constant 0.000000e+00 : f32
    %56 = vector.broadcast %cst_26 : f32 to vector<32x512xf32>
    %57 = arith.maximumf %55, %56 : vector<32x512xf32>
    %c0_27 = arith.constant 0 : index
    %c0_28 = arith.constant 0 : index
    %58 = vector.load %arg4[%c0_27, %c0_28] : memref<32x512xf32, #tpu.memory_space<vmem>>, vector<32x512xf32>
    tpu.vector_store %arg4[%c0_27, %c0_28], %57 {strides = array<i32>} : memref<32x512xf32, #tpu.memory_space<vmem>>, vector<32x512xf32>,
    return
  }
  func.func @transform_0(%arg0: i32) -> (i32, i32) {
    %c0_i32 = arith.constant 0 : i32
    %c0_i32_0 = arith.constant 0 : i32
    return %c0_i32, %arg0 : i32, i32
  }
  func.func @transform_1(%arg0: i32) -> (i32, i32) {
    %c0_i32 = arith.constant 0 : i32
    %c0_i32_0 = arith.constant 0 : i32
    %c0_i32_1 = arith.constant 0 : i32
    return %c0_i32, %c0_i32_0 : i32, i32
  }
  func.func @transform_2(%arg0: i32) -> (i32, i32) {
    %c0_i32 = arith.constant 0 : i32
    %c0_i32_0 = arith.constant 0 : i32
    %c0_i32_1 = arith.constant 0 : i32
    return %c0_i32, %c0_i32_0 : i32, i32
  }
  func.func @transform_3(%arg0: i32) -> (i32, i32) {
    %c0_i32 = arith.constant 0 : i32
    %c0_i32_0 = arith.constant 0 : i32
    return %c0_i32, %arg0 : i32, i32
  }
}

</mosaic_0001>

<llo_original>
// kernel: tpu_custom_call.1
$region0: #{tpu_custom_call.1}
  #allocation0 [shape = 'u32[]', space=smem, size = 0x4, offset = 0x4, fixed_abs, tag = 'smem constant byte address 0x4 - core index']
  #allocation1 [shape = 'u32[144,128]{1,0:T(1,128)}', space=vmem, size = 0x12000, scoped, tag = 'internal scratch']
  #allocation2 [shape = 'f32[8,512]{1,0:T(8,128)}', space=vmem, size = 0x4000, scoped, tag = 'scratch operand']
  %s0 = inlined_call_operand.vmem [shape: f32[1,1024], index: 0, kind: input, shape index: {}]
  %s1 = inlined_call_operand.vmem [shape: f32[32,8], index: 1, kind: input, shape index: {}]
  %s2 = inlined_call_operand.vmem [shape: f32[32,32], index: 2, kind: input, shape index: {}]
  %s3 = inlined_call_operand.hbm [shape: f32[32,1024], index: 3, kind: output, shape index: {}]
  %s4 = sld [smem:[#allocation0]]
  $region45: #{tpu_custom_call.1} parent=0
    _
  %s6 = ssub.s32 1, %s4
  %s7 = scalar_select 0, %s6, %s4
  $region1: #{tpu_custom_call.1} parent=0
    #allocation3 [shape = 'u8[131072]{0}', space=vmem, size = 0x20000, scoped, tag = 'output window, operand 0']
    #allocation4 [shape = 's32[2]{0}', space=sflag, size = 0x8, scoped, tag = 'scoped memory for tpu_custom_call.1']
    %8 = vsyncpa [#allocation4], 0
    %s9 = scalar_lea.sflag [#allocation4], 1
    %10 = vsyncpa %s9, 0
    loop: start=0, step=1, limit=4
    $region2: #{tpu_custom_call.1} parent=1 // loop_pre_header
      _
    $region3: #{tpu_custom_call.1} parent=1 // loop_header
      %s12 = sphi 0, %s16
      %p13 = scmp.ge.s32.totalorder %s12, 4
      %s22 = sphi 0, %s24
      %s25 = sphi 0, %s22
      %s26 = sphi 0, %s25
      %s42 = sphi 0, %s26
      %s46 = sphi 0, %s46
      %s48 = sphi 0, %s46
      %s49 = sphi 0, %s48
      %s63 = sphi 0, %s49
      %s67 = sphi 0, %s67
      %s69 = sphi 0, %s67
      %s70 = sphi 0, %s69
      %s84 = sphi 0, %s70
      %s90 = sphi 0, %s92
      %s93 = sphi 0, %s90
      %s94 = sphi 0, %s93
      %s110 = sphi 0, %s94
    $region4: #{tpu_custom_call.1} parent=1 // loop_header_branch
      %15 = sbr.rel (%p13) target = $region8
    $region5: #{tpu_custom_call.1} parent=1 // loop_body
      %s17 = ssub.s32 %s12, 1
      %s18 = ssub.s32 %s12, 2
      %s19 = sadd.s32 %s12, 1
      %s20 = ssub.s32 %s12, %s19
      %p21 = scmp.eq.s32.totalorder %s20, 0
      %s23 = sadd.s32 %s22, 1
      %s24 = scalar_select %p21, %s22, %s23
      %p27 = pneg %p21
      %p28 = scmp.eq.s32.totalorder %s12, 1
      %p29 = por %p27, %p28
      %p30 = scmp.ne.s32.totalorder %s22, %s25
      %p31 = scmp.eq.s32.totalorder %s12, 0
      %p32 = por %p30, %p31
      %p33 = scmp.ne.s32.totalorder %s22, %s25
      %p34 = scmp.eq.s32.totalorder %s17, 1
      %p35 = por %p33, %p34
      %p36 = scmp.ne.s32.totalorder %s25, %s26
      %p37 = scmp.eq.s32.totalorder %s17, 0
      %p38 = por %p36, %p37
      %p39 = scmp.ne.s32.totalorder %s25, %s26
      %p40 = scmp.eq.s32.totalorder %s18, 1
      %p41 = por %p39, %p40
      %p43 = scmp.ne.s32.totalorder %s26, %s42
      %p44 = scmp.eq.s32.totalorder %s18, 0
      %p45 = por %p43, %p44
      %s47 = sadd.s32 %s46, 1
      %p50 = scmp.eq.s32.totalorder %s12, 1
      %p51 = scmp.ne.s32.totalorder %s46, %s48
      %p52 = scmp.eq.s32.totalorder %s12, 0
      %p53 = por %p51, %p52
      %p54 = scmp.ne.s32.totalorder %s46, %s48
      %p55 = scmp.eq.s32.totalorder %s17, 1
      %p56 = por %p54, %p55
      %p57 = scmp.ne.s32.totalorder %s48, %s49
      %p58 = scmp.eq.s32.totalorder %s17, 0
      %p59 = por %p57, %p58
      %p60 = scmp.ne.s32.totalorder %s48, %s49
      %p61 = scmp.eq.s32.totalorder %s18, 1
      %p62 = por %p60, %p61
      %p64 = scmp.ne.s32.totalorder %s49, %s63
      %p65 = scmp.eq.s32.totalorder %s18, 0
      %p66 = por %p64, %p65
      %s68 = sadd.s32 %s67, 1
      %p71 = scmp.eq.s32.totalorder %s12, 1
      %p72 = scmp.ne.s32.totalorder %s67, %s69
      %p73 = scmp.eq.s32.totalorder %s12, 0
      %p74 = por %p72, %p73
      %p75 = scmp.ne.s32.totalorder %s67, %s69
      %p76 = scmp.eq.s32.totalorder %s17, 1
      %p77 = por %p75, %p76
      %p78 = scmp.ne.s32.totalorder %s69, %s70
      %p79 = scmp.eq.s32.totalorder %s17, 0
      %p80 = por %p78, %p79
      %p81 = scmp.ne.s32.totalorder %s69, %s70
      %p82 = scmp.eq.s32.totalorder %s18, 1
      %p83 = por %p81, %p82
      %p85 = scmp.ne.s32.totalorder %s70, %s84
      %p86 = scmp.eq.s32.totalorder %s18, 0
      %p87 = por %p85, %p86
      %s88 = ssub.s32 %s12, %s19
      %p89 = scmp.eq.s32.totalorder %s88, 0
      %s91 = sadd.s32 %s90, 1
      %s92 = scalar_select %p89, %s90, %s91
      %p95 = pneg %p89
      %p96 = scmp.eq.s32.totalorder %s12, 1
      %p97 = por %p95, %p96
      %p98 = scmp.ne.s32.totalorder %s90, %s93
      %p99 = scmp.eq.s32.totalorder %s12, 0
      %p100 = por %p98, %p99
      %p101 = scmp.ne.s32.totalorder %s90, %s93
      %p102 = scmp.eq.s32.totalorder %s17, 1
      %p103 = por %p101, %p102
      %p104 = scmp.ne.s32.totalorder %s93, %s94
      %p105 = scmp.eq.s32.totalorder %s17, 0
      %p106 = por %p104, %p105
      %p107 = scmp.ne.s32.totalorder %s93, %s94
      %p108 = scmp.eq.s32.totalorder %s18, 1
      %p109 = por %p107, %p108
      %p111 = scmp.ne.s32.totalorder %s94, %s110
      %p112 = scmp.eq.s32.totalorder %s18, 0
      %p113 = por %p111, %p112
      %p114 = scmp.le.s32.totalorder 1, %s12
      %p115 = scmp.lt.s32.totalorder %s12, 3
      %p116 = pnand %p114, %p115
      %p117 = pneg %p116
      // Predicated region
      $region9: #{tpu_custom_call.1} parent=5 // pred_check
        _
      $region10: #{tpu_custom_call.1} parent=5 // pred_check_branch
        %119 = sbr.rel (%p116) target = $region12
      $region11: #{tpu_custom_call.1} parent=5 // pred_region
        %s120 = ssub.s32 %s12, 1
        // Predicated region
        $region13: #{tpu_custom_call.1} parent=11 // pred_check
          %p121 = pneg %p59
        $region14: #{tpu_custom_call.1} parent=11 // pred_check_branch
          %123 = sbr.rel (%p121) target = $region16
        $region15: #{tpu_custom_call.1} parent=11 // pred_region
          _
        $region16: #{tpu_custom_call.1} parent=11 // pred_fallthru
          _
        // Predicated region
        $region17: #{tpu_custom_call.1} parent=11 // pred_check
          %p124 = pneg %p80
        $region18: #{tpu_custom_call.1} parent=11 // pred_check_branch
          %126 = sbr.rel (%p124) target = $region20
        $region19: #{tpu_custom_call.1} parent=11 // pred_region
          _
        $region20: #{tpu_custom_call.1} parent=11 // pred_fallthru
          _
      $region12: #{tpu_custom_call.1} parent=5 // pred_fallthru
        _
      %p127 = scmp.lt.s32.totalorder %s12, 2
      // Predicated region
      $region21: #{tpu_custom_call.1} parent=5 // pred_check
        %p128 = pneg %p127
      $region22: #{tpu_custom_call.1} parent=5 // pred_check_branch
        %130 = sbr.rel (%p128) target = $region24
      $region23: #{tpu_custom_call.1} parent=5 // pred_region
        // Predicated region
        $region25: #{tpu_custom_call.1} parent=23 // pred_check
          %p131 = pneg %p32
        $region26: #{tpu_custom_call.1} parent=23 // pred_check_branch
          %133 = sbr.rel (%p131) target = $region28
        $region27: #{tpu_custom_call.1} parent=23 // pred_region
          %s134 = smul.u32 4, %s12
          %p135 = scmp.lt.s32.totalorder %s134, 7
          %s136 = scalar_select %p135, %s134, 7
          %s137 = scalar_lea.vmem %s0, %s136
          %s138 = smul.u32 4, %s12
        $region28: #{tpu_custom_call.1} parent=23 // pred_fallthru
          _
      $region24: #{tpu_custom_call.1} parent=5 // pred_fallthru
        _
      %p139 = scmp.le.s32.totalorder 1, %s12
      %p140 = scmp.lt.s32.totalorder %s12, 3
      %p141 = pnand %p139, %p140
      %p142 = pneg %p141
      // Predicated region
      $region29: #{tpu_custom_call.1} parent=5 // pred_check
        _
      $region30: #{tpu_custom_call.1} parent=5 // pred_check_branch
        %144 = sbr.rel (%p141) target = $region32
      $region31: #{tpu_custom_call.1} parent=5 // pred_region
        %s145 = ssub.s32 %s12, 1
        %s146 = smul.u32 4, %s17
        %p147 = scmp.lt.s32.totalorder %s146, 7
        %s148 = scalar_select %p147, %s146, 7
        %s149 = scalar_lea.vmem %s0, %s148
        %p150 = pneg %p38
        %p151 = pneg %p35
        %p152 = pneg %p59
        %p153 = pneg %p56
        %p154 = pneg %p80
        %p155 = pneg %p77
        %p156 = pneg %p106
        %p157 = pneg %p103
        %s158 = sand.u32 %s93, 1
        %s159 = scalar_lea.sflag [#allocation4], %s158
        %s160 = sand.u32 %s93, 1
        %s161 = smul.addr %s160, 128
        %s162 = scalar_lea.vmem [#allocation3], %s161
        %s163 = smul.u32 4, %s17
        %p164 = scmp.lt.s32.totalorder %s163, 7
        %s165 = scalar_select %p164, %s163, 7
        %s166 = scalar_lea.vmem %s0, %s165
        %s167 = smul.u32 4, %s17
        %s168 = smul.u32 4, %s17
        %v169 = vld [vmem:[%s166] sm:$0xf]
        %vm170 = vcmp.ge.f32.partialorder %v169, 0.0
        %vm171 = vcmp.le.f32.partialorder %v169, 2.0
        %vm172 = vmand %vm170, %vm171
        %v173 = vsel %vm172, %v169, 0.0
        %v174 = vadd.f32 %v173, 1e-08
        %v175 = vrcp.pop %v174
        %v176 = vmul.f32 1.0, %v175
        %v177 = vmul.f32 %v173, 1.5707964
        %v178 = vand.u32 2147483647, %v177
        %vm179 = vcmp.le.f32.partialorder %v178, 0.7853982
        %vm180 = vcmp.lt.s32.totalorder %v177, 0
        %v181 = vand.u32 %v177, 2139095040
        %v182 = vshrl.u32 %v181, 23
        %v183 = vsub.s32 %v182, 127
        %v184 = vand.u32 2147483647, %v177
        %v185 = vand.u32 %v184, 8388607
        %v186 = vor.u32 %v185, 8388608
        %v187 = vsub.s32 0, %v186
        %v188 = vadd.s32 %v183, 1
        %vm189 = vcmp.gt.s32.totalorder %v188, 0
        %v190 = vsel %vm189, %v188, 0
        %v191 = vshrl.u32 %v190, 5
        %v192 = vand.u32 %v190, 31
        %v193 = vsub.s32 32, %v192
        %v194 = vshrl.u32 683565275, %v193
        %v195 = vshll.u32 683565275, %v192
        %v196 = vshrl.u32 2475754826, %v193
        %v197 = vor.u32 %v195, %v196
        %v198 = vshll.u32 2475754826, %v192
        %v199 = vshrl.u32 2131351028, %v193
        %v200 = vor.u32 %v198, %v199
        %v201 = vshll.u32 2131351028, %v192
        %v202 = vshrl.u32 2102212464, %v193
        %v203 = vor.u32 %v201, %v202
        %v204 = vshll.u32 2102212464, %v192
        %v205 = vshrl.u32 920167782, %v193
        %v206 = vor.u32 %v204, %v205
        %v207 = vshll.u32 920167782, %v192
        %v208 = vshrl.u32 1326507024, %v193
        %v209 = vor.u32 %v207, %v208
        %vm210 = vcmp.lt.s32.totalorder %v191, 1
        %vm211 = vcmp.lt.s32.totalorder %v191, 2
        %vm212 = vcmp.lt.s32.totalorder %v191, 3
        %vm213 = vcmp.lt.s32.totalorder %v191, 4
        %v214 = vsel %vm210, %v194, %v197
        %v215 = vsel %vm213, %v203, 2102212464
        %v216 = vsel %vm212, %v200, %v215
        %v217 = vsel %vm211, %v214, %v216
        %v218 = vsel %vm210, %v197, %v200
        %v219 = vsel %vm213, %v206, 920167782
        %v220 = vsel %vm212, %v203, %v219
        %v221 = vsel %vm211, %v218, %v220
        %v222 = vsel %vm210, %v200, %v203
        %v223 = vsel %vm213, %v209, 1326507024
        %v224 = vsel %vm212, %v206, %v223
        %v225 = vsel %vm211, %v222, %v224
        %v226 = vshll.u32 %v186, 8
        %v227 = vmul.u32.u64.compose %v226, %v225
        %v228 = vextract.low.u32 %v227
        %v229 = vextract.high.u32 %v227
        %v230 = vmul.u32.u64.compose %v226, %v221
        %v231 = vextract.low.u32 %v230
        %v232 = vextract.high.u32 %v230
        %v233 = vmul.u32 %v226, %v217
        %v234 = vadd.s32 %v229, %v231
        %vm235 = vc.u32 %v229, %v231
        %v236 = vadd.s32 %v232, 1
        %v237 = vsel %vm235, %v236, %v232
        %v238 = vadd.s32 %v233, %v237
        %v239 = vadd.s32 %v238, 536870912
        %v240 = vshrl.u32 %v239, 30
        %v241 = vshll.u32 %v240, 30
        %v242 = vsub.s32 %v238, %v241
        %vm243 = vcmp.lt.s32.totalorder %v242, 0
        %v244 = vsub.s32 0, %v242
        %v245 = vsel %vm243, %v244, %v242
        %v246 = vclz %v245
        %v247 = vsub.s32 %v246, 2
        %vm248 = vcmp.gt.s32.totalorder 0, %v247
        %v249 = vsel %vm248, 0, %v247
        %v250 = vsub.s32 32, %v249
        %v251 = vshll.u32 %v242, %v249
        %v252 = vshrl.u32 %v234, %v250
        %v253 = vor.u32 %v251, %v252
        %v254 = vsub.s32 4294967266, %v249
        %v255 = vadd.s32 %v254, 127
        %v256 = vshll.u32 %v255, 23
        %v257 = vor.u32 4788187, %v256
        %v258 = vand.u32 2147483647, %v257
        %v260 = vcvt.s32.f32 %v253
        %v261 = vmul.f32 %v260, %v258
        %v262 = vxor.u32 %v261, 2147483648
        %v263 = vsel %vm180, %v262, %v261
        %v264 = vsub.s32 4, %v240
        %v265 = vsel %vm180, %v264, %v240
        %v266 = vsel %vm179, %v177, %v263
        %v267 = vsel %vm179, 0, %v265
        %v268 = vcosq.f32.pop %v266
        %v269 = vsinq.f32.pop %v266
        %vm270 = vweird.f32 %v177
        %v271 = vadd.s32 %v267, 3
        %v272 = vand.u32 %v271, 3
        %vm273 = vcmp.lt.s32.totalorder %v272, 2
        %vm274 = vcmp.eq.s32.totalorder %v272, 0
        %v275 = vxor.u32 %v269, 2147483648
        %v276 = vsel %vm274, %v268, %v275
        %vm277 = vcmp.eq.s32.totalorder %v272, 2
        %v278 = vxor.u32 %v268, 2147483648
        %v279 = vsel %vm277, %v278, %v269
        %v280 = vsel %vm273, %v276, %v279
        %v281 = vsel %vm270, nan, %v280
        %v282 = vand.u32 2147483647, %v177
        %vm283 = vcmp.le.f32.partialorder %v282, 0.7853982
        %vm284 = vcmp.lt.s32.totalorder %v177, 0
        %v285 = vand.u32 %v177, 2139095040
        %v286 = vshrl.u32 %v285, 23
        %v287 = vsub.s32 %v286, 127
        %v288 = vand.u32 2147483647, %v177
        %v289 = vand.u32 %v288, 8388607
        %v290 = vor.u32 %v289, 8388608
        %v291 = vsub.s32 0, %v290
        %v292 = vadd.s32 %v287, 1
        %vm293 = vcmp.gt.s32.totalorder %v292, 0
        %v294 = vsel %vm293, %v292, 0
        %v295 = vshrl.u32 %v294, 5
        %v296 = vand.u32 %v294, 31
        %v297 = vsub.s32 32, %v296
        %v298 = vshrl.u32 683565275, %v297
        %v299 = vshll.u32 683565275, %v296
        %v300 = vshrl.u32 2475754826, %v297
        %v301 = vor.u32 %v299, %v300
        %v302 = vshll.u32 2475754826, %v296
        %v303 = vshrl.u32 2131351028, %v297
        %v304 = vor.u32 %v302, %v303
        %v305 = vshll.u32 2131351028, %v296
        %v306 = vshrl.u32 2102212464, %v297
        %v307 = vor.u32 %v305, %v306
        %v308 = vshll.u32 2102212464, %v296
        %v309 = vshrl.u32 920167782, %v297
        %v310 = vor.u32 %v308, %v309
        %v311 = vshll.u32 920167782, %v296
        %v312 = vshrl.u32 1326507024, %v297
        %v313 = vor.u32 %v311, %v312
        %vm314 = vcmp.lt.s32.totalorder %v295, 1
        %vm315 = vcmp.lt.s32.totalorder %v295, 2
        %vm316 = vcmp.lt.s32.totalorder %v295, 3
        %vm317 = vcmp.lt.s32.totalorder %v295, 4
        %v318 = vsel %vm314, %v298, %v301
        %v319 = vsel %vm317, %v307, 2102212464
        %v320 = vsel %vm316, %v304, %v319
        %v321 = vsel %vm315, %v318, %v320
        %v322 = vsel %vm314, %v301, %v304
        %v323 = vsel %vm317, %v310, 920167782
        %v324 = vsel %vm316, %v307, %v323
        %v325 = vsel %vm315, %v322, %v324
        %v326 = vsel %vm314, %v304, %v307
        %v327 = vsel %vm317, %v313, 1326507024
        %v328 = vsel %vm316, %v310, %v327
        %v329 = vsel %vm315, %v326, %v328
        %v330 = vshll.u32 %v290, 8
        %v331 = vmul.u32.u64.compose %v330, %v329
        %v332 = vextract.low.u32 %v331
        %v333 = vextract.high.u32 %v331
        %v334 = vmul.u32.u64.compose %v330, %v325
        %v335 = vextract.low.u32 %v334
        %v336 = vextract.high.u32 %v334
        %v337 = vmul.u32 %v330, %v321
        %v338 = vadd.s32 %v333, %v335
        %vm339 = vc.u32 %v333, %v335
        %v340 = vadd.s32 %v336, 1
        %v341 = vsel %vm339, %v340, %v336
        %v342 = vadd.s32 %v337, %v341
        %v343 = vadd.s32 %v342, 536870912
        %v344 = vshrl.u32 %v343, 30
        %v345 = vshll.u32 %v344, 30
        %v346 = vsub.s32 %v342, %v345
        %vm347 = vcmp.lt.s32.totalorder %v346, 0
        %v348 = vsub.s32 0, %v346
        %v349 = vsel %vm347, %v348, %v346
        %v350 = vclz %v349
        %v351 = vsub.s32 %v350, 2
        %vm352 = vcmp.gt.s32.totalorder 0, %v351
        %v353 = vsel %vm352, 0, %v351
        %v354 = vsub.s32 32, %v353
        %v355 = vshll.u32 %v346, %v353
        %v356 = vshrl.u32 %v338, %v354
        %v357 = vor.u32 %v355, %v356
        %v358 = vsub.s32 4294967266, %v353
        %v359 = vadd.s32 %v358, 127
        %v360 = vshll.u32 %v359, 23
        %v361 = vor.u32 4788187, %v360
        %v362 = vand.u32 2147483647, %v361
        %v364 = vcvt.s32.f32 %v357
        %v365 = vmul.f32 %v364, %v362
        %v366 = vxor.u32 %v365, 2147483648
        %v367 = vsel %vm284, %v366, %v365
        %v368 = vsub.s32 4, %v344
        %v369 = vsel %vm284, %v368, %v344
        %v370 = vsel %vm283, %v177, %v367
        %v371 = vsel %vm283, 0, %v369
        %v372 = vcosq.f32.pop %v370
        %v373 = vsinq.f32.pop %v370
        %vm374 = vweird.f32 %v177
        %v375 = vand.u32 %v371, 3
        %vm376 = vcmp.lt.s32.totalorder %v375, 2
        %vm377 = vcmp.eq.s32.totalorder %v375, 0
        %v378 = vxor.u32 %v373, 2147483648
        %v379 = vsel %vm377, %v372, %v378
        %vm380 = vcmp.eq.s32.totalorder %v375, 2
        %v381 = vxor.u32 %v372, 2147483648
        %v382 = vsel %vm380, %v381, %v373
        %v383 = vsel %vm376, %v379, %v382
        %v384 = vsel %vm374, nan, %v383
        %v385 = vmul.f32 %v384, 2.0
        %v386 = vmul.f32 %v281, %v176
        %v387 = vlaneseq
        %vm388 = vcmp.ge.s32.totalorder %v387, 0
        %vm389 = vcmp.lt.s32.totalorder %v387, 512
        %vm390 = vmand %vm388, %vm389
        %391 = vst.msk [vmem:[#allocation2] ss:$8 sm:$0xf] %vm390, %v386
        %392 = vst.msk [vmem:[#allocation2] ss:$8 sm:$0x0] %vm390, %v386
        %v393 = vmul.f32 %v385, %v281
        %v394 = vmul.f32 %v393, %v176
        %s395 = scalar_lea.vmem [#allocation2], 1
        %396 = vst.msk [vmem:[%s395] ss:$8 sm:$0xf] %vm390, %v394
        %397 = vst.msk [vmem:[%s395] ss:$8 sm:$0x0] %vm390, %v394
        %v398 = vmul.f32 %v385, %v393
        %v399 = vsub.f32 %v398, %v281
        %v400 = vmul.f32 %v399, %v176
        %s401 = scalar_lea.vmem [#allocation2], 2
        %402 = vst.msk [vmem:[%s401] ss:$8 sm:$0xf] %vm390, %v400
        %403 = vst.msk [vmem:[%s401] ss:$8 sm:$0x0] %vm390, %v400
        %v404 = vmul.f32 %v385, %v399
        %v405 = vsub.f32 %v404, %v393
        %v406 = vmul.f32 %v405, %v176
        %s407 = scalar_lea.vmem [#allocation2], 3
        %408 = vst.msk [vmem:[%s407] ss:$8 sm:$0xf] %vm390, %v406
        %409 = vst.msk [vmem:[%s407] ss:$8 sm:$0x0] %vm390, %v406
        %v410 = vmul.f32 %v385, %v405
        %v411 = vsub.f32 %v410, %v399
        %v412 = vmul.f32 %v411, %v176
        %s413 = scalar_lea.vmem [#allocation2], 4
        %414 = vst.msk [vmem:[%s413] ss:$8 sm:$0xf] %vm390, %v412
        %415 = vst.msk [vmem:[%s413] ss:$8 sm:$0x0] %vm390, %v412
        %v416 = vmul.f32 %v385, %v411
        %v417 = vsub.f32 %v416, %v405
        %v418 = vmul.f32 %v417, %v176
        %s419 = scalar_lea.vmem [#allocation2], 5
        %420 = vst.msk [vmem:[%s419] ss:$8 sm:$0xf] %vm390, %v418
        %421 = vst.msk [vmem:[%s419] ss:$8 sm:$0x0] %vm390, %v418
        %v422 = vmul.f32 %v385, %v417
        %v423 = vsub.f32 %v422, %v411
        %v424 = vmul.f32 %v423, %v176
        %s425 = scalar_lea.vmem [#allocation2], 6
        %426 = vst.msk [vmem:[%s425] ss:$8 sm:$0xf] %vm390, %v424
        %427 = vst.msk [vmem:[%s425] ss:$8 sm:$0x0] %vm390, %v424
        %v428 = vmul.f32 %v385, %v423
        %v429 = vsub.f32 %v428, %v417
        %v430 = vmul.f32 %v429, %v176
        %s431 = scalar_lea.vmem [#allocation2], 7
        %432 = vst.msk [vmem:[%s431] ss:$8 sm:$0xf] %vm390, %v430
        %433 = vst.msk [vmem:[%s431] ss:$8 sm:$0x0] %vm390, %v430
        %v434 = vld [vmem:[#allocation2] sm:$0xff]
        %v435 = vld [vmem:[#allocation2 + $0x8] sm:$0xff]
        %v436 = vld [vmem:[#allocation2 + $0x10] sm:$0xff]
        %v437 = vld [vmem:[#allocation2 + $0x18] sm:$0xff]
        %v438 = vld [vmem:[%s1] sm:$0xff]
        %v439 = vld [vmem:[%s1 + $0x8] sm:$0xff]
        %v440 = vld [vmem:[%s1 + $0x10] sm:$0xff]
        %v441 = vld [vmem:[%s1 + $0x18] sm:$0xff]
        %vm442 = vcmask 64512
        %v444 = vsel %vm442, %v438, 0
        %v447 = vsel %vm442, %v439, 0
        %v450 = vsel %vm442, %v440, 0
        %v453 = vsel %vm442, %v441, 0
        %455 = vmatprep.subr.mxu0 %v435
        %456 = vmatpush1.msra.mxu0 %v434
        %457 = vmatprep.subr.mxu0 0.0
        %458 = vmatpush1.msra.mxu0 0.0
        %459 = vmatprep.subr.mxu0 0.0
        %460 = vmatpush1.msra.mxu0 0.0
        %461 = vmatprep.subr.mxu0 0.0
        %462 = vmatpush1.msra.mxu0 0.0
        %463 = vmatprep.subr.mxu0 0.0
        %464 = vmatpush1.msra.mxu0 0.0
        %465 = vmatprep.subr.mxu0 0.0
        %466 = vmatpush1.msra.mxu0 0.0
        %467 = vmatprep.subr.mxu0 0.0
        %468 = vmatpush1.msra.mxu0 0.0
        %469 = vmatprep.subr.mxu0 0.0
        %470 = vmatpush1.msra.mxu0 0.0
        %471 = vmatprep.subr.mxu0 0.0
        %472 = vmatpush1.msra.mxu0 0.0
        %473 = vmatprep.subr.mxu0 0.0
        %474 = vmatpush1.msra.mxu0 0.0
        %475 = vmatprep.subr.mxu0 0.0
        %476 = vmatpush1.msra.mxu0 0.0
        %477 = vmatprep.subr.mxu0 0.0
        %478 = vmatpush1.msra.mxu0 0.0
        %479 = vmatprep.subr.mxu0 0.0
        %480 = vmatpush1.msra.mxu0 0.0
        %481 = vmatprep.subr.mxu0 0.0
        %482 = vmatpush1.msra.mxu0 0.0
        %483 = vmatprep.subr.mxu0 0.0
        %484 = vmatpush1.msra.mxu0 0.0
        %485 = vmatprep.subr.mxu0 0.0
        %486 = vmatpush1.msra.mxu0 0.0
        %487 = vmatprep.subr.mxu0 0.0
        %488 = vmatpush1.msra.mxu0 0.0
        %489 = vmatprep.subr.mxu0 0.0
        %490 = vmatpush1.msra.mxu0 0.0
        %491 = vmatprep.subr.mxu0 0.0
        %492 = vmatpush1.msra.mxu0 0.0
        %493 = vmatprep.subr.mxu0 0.0
        %494 = vmatpush1.msra.mxu0 0.0
        %495 = vmatprep.subr.mxu0 0.0
        %496 = vmatpush1.msra.mxu0 0.0
        %497 = vmatprep.subr.mxu0 0.0
        %498 = vmatpush1.msra.mxu0 0.0
        %499 = vmatprep.subr.mxu0 0.0
        %500 = vmatpush1.msra.mxu0 0.0
        %501 = vmatprep.subr.mxu0 0.0
        %502 = vmatpush1.msra.mxu0 0.0
        %503 = vmatprep.subr.mxu0 0.0
        %504 = vmatpush1.msra.mxu0 0.0
        %505 = vmatprep.subr.mxu0 0.0
        %506 = vmatpush1.msra.mxu0 0.0
        %507 = vmatprep.subr.mxu0 0.0
        %508 = vmatpush1.msra.mxu0 0.0
        %509 = vmatprep.subr.mxu0 0.0
        %510 = vmatpush1.msra.mxu0 0.0
        %511 = vmatprep.subr.mxu0 0.0
        %512 = vmatpush1.msra.mxu0 0.0
        %513 = vmatprep.subr.mxu0 0.0
        %514 = vmatpush1.msra.mxu0 0.0
        %515 = vmatprep.subr.mxu0 0.0
        %516 = vmatpush1.msra.mxu0 0.0
        %517 = vmatprep.subr.mxu0 0.0
        %518 = vmatpush1.msra.mxu0 0.0
        %519 = vmatprep.mubr.f32.mxu0 0.0
        %520 = vmatmul.mubr.f32.gmra.mrb[0].mxu0 %v444
        %v521 = vpop.f32.mrb[0].mxu0
        %v522 = vadd.f32 0.0, %v521
        %v523 = vpop.f32.mrb[0].mxu0
        %v524 = vadd.f32 0.0, %v523
        %525 = vmatprep.mubr.f32.mxu0 0.0
        %526 = vmatmul.mubr.f32.gmra.mrb[0].mxu0 %v447
        %v527 = vpop.f32.mrb[0].mxu0
        %v528 = vadd.f32 0.0, %v527
        %v529 = vpop.f32.mrb[0].mxu0
        %v530 = vadd.f32 0.0, %v529
        %531 = vmatprep.mubr.f32.mxu0 0.0
        %532 = vmatmul.mubr.f32.gmra.mrb[0].mxu0 %v450
        %v533 = vpop.f32.mrb[0].mxu0
        %v534 = vadd.f32 0.0, %v533
        %v535 = vpop.f32.mrb[0].mxu0
        %v536 = vadd.f32 0.0, %v535
        %537 = vmatprep.mubr.f32.mxu0 0.0
        %538 = vmatmul.mubr.f32.gmra.mrb[0].mxu0 %v453
        %v539 = vpop.f32.mrb[0].mxu0
        %v540 = vadd.f32 0.0, %v539
        %v541 = vpop.f32.mrb[0].mxu0
        %v542 = vadd.f32 0.0, %v541
        %543 = vdwg.mxu0
        %544 = vmatprep.subr.mxu0 %v437
        %545 = vmatpush1.msra.mxu0 %v436
        %546 = vmatprep.subr.mxu0 0.0
        %547 = vmatpush1.msra.mxu0 0.0
        %548 = vmatprep.subr.mxu0 0.0
        %549 = vmatpush1.msra.mxu0 0.0
        %550 = vmatprep.subr.mxu0 0.0
        %551 = vmatpush1.msra.mxu0 0.0
        %552 = vmatprep.subr.mxu0 0.0
        %553 = vmatpush1.msra.mxu0 0.0
        %554 = vmatprep.subr.mxu0 0.0
        %555 = vmatpush1.msra.mxu0 0.0
        %556 = vmatprep.subr.mxu0 0.0
        %557 = vmatpush1.msra.mxu0 0.0
        %558 = vmatprep.subr.mxu0 0.0
        %559 = vmatpush1.msra.mxu0 0.0
        %560 = vmatprep.subr.mxu0 0.0
        %561 = vmatpush1.msra.mxu0 0.0
        %562 = vmatprep.subr.mxu0 0.0
        %563 = vmatpush1.msra.mxu0 0.0
        %564 = vmatprep.subr.mxu0 0.0
        %565 = vmatpush1.msra.mxu0 0.0
        %566 = vmatprep.subr.mxu0 0.0
        %567 = vmatpush1.msra.mxu0 0.0
        %568 = vmatprep.subr.mxu0 0.0
        %569 = vmatpush1.msra.mxu0 0.0
        %570 = vmatprep.subr.mxu0 0.0
        %571 = vmatpush1.msra.mxu0 0.0
        %572 = vmatprep.subr.mxu0 0.0
        %573 = vmatpush1.msra.mxu0 0.0
        %574 = vmatprep.subr.mxu0 0.0
        %575 = vmatpush1.msra.mxu0 0.0
        %576 = vmatprep.subr.mxu0 0.0
        %577 = vmatpush1.msra.mxu0 0.0
        %578 = vmatprep.subr.mxu0 0.0
        %579 = vmatpush1.msra.mxu0 0.0
        %580 = vmatprep.subr.mxu0 0.0
        %581 = vmatpush1.msra.mxu0 0.0
        %582 = vmatprep.subr.mxu0 0.0
        %583 = vmatpush1.msra.mxu0 0.0
        %584 = vmatprep.subr.mxu0 0.0
        %585 = vmatpush1.msra.mxu0 0.0
        %586 = vmatprep.subr.mxu0 0.0
        %587 = vmatpush1.msra.mxu0 0.0
        %588 = vmatprep.subr.mxu0 0.0
        %589 = vmatpush1.msra.mxu0 0.0
        %590 = vmatprep.subr.mxu0 0.0
        %591 = vmatpush1.msra.mxu0 0.0
        %592 = vmatprep.subr.mxu0 0.0
        %593 = vmatpush1.msra.mxu0 0.0
        %594 = vmatprep.subr.mxu0 0.0
        %595 = vmatpush1.msra.mxu0 0.0
        %596 = vmatprep.subr.mxu0 0.0
        %597 = vmatpush1.msra.mxu0 0.0
        %598 = vmatprep.subr.mxu0 0.0
        %599 = vmatpush1.msra.mxu0 0.0
        %600 = vmatprep.subr.mxu0 0.0
        %601 = vmatpush1.msra.mxu0 0.0
        %602 = vmatprep.subr.mxu0 0.0
        %603 = vmatpush1.msra.mxu0 0.0
        %604 = vmatprep.subr.mxu0 0.0
        %605 = vmatpush1.msra.mxu0 0.0
        %606 = vmatprep.subr.mxu0 0.0
        %607 = vmatpush1.msra.mxu0 0.0
        %608 = vmatprep.mubr.f32.mxu0 0.0
        %609 = vmatmul.mubr.f32.gmra.mrb[0].mxu0 %v444
        %v610 = vpop.f32.mrb[0].mxu0
        %v611 = vadd.f32 0.0, %v610
        %v612 = vpop.f32.mrb[0].mxu0
        %v613 = vadd.f32 0.0, %v612
        %614 = vmatprep.mubr.f32.mxu0 0.0
        %615 = vmatmul.mubr.f32.gmra.mrb[0].mxu0 %v447
        %v616 = vpop.f32.mrb[0].mxu0
        %v617 = vadd.f32 0.0, %v616
        %v618 = vpop.f32.mrb[0].mxu0
        %v619 = vadd.f32 0.0, %v618
        %620 = vmatprep.mubr.f32.mxu0 0.0
        %621 = vmatmul.mubr.f32.gmra.mrb[0].mxu0 %v450
        %v622 = vpop.f32.mrb[0].mxu0
        %v623 = vadd.f32 0.0, %v622
        %v624 = vpop.f32.mrb[0].mxu0
        %v625 = vadd.f32 0.0, %v624
        %626 = vmatprep.mubr.f32.mxu0 0.0
        %627 = vmatmul.mubr.f32.gmra.mrb[0].mxu0 %v453
        %v628 = vpop.f32.mrb[0].mxu0
        %v629 = vadd.f32 0.0, %v628
        %v630 = vpop.f32.mrb[0].mxu0
        %v631 = vadd.f32 0.0, %v630
        %632 = vdwg.mxu0
        %v633 = vmax.f32 %v522, 0.0
        %v634 = vmax.f32 %v524, 0.0
        %v635 = vmax.f32 %v611, 0.0
        %v636 = vmax.f32 %v613, 0.0
        %v637 = vmax.f32 %v528, 0.0
        %v638 = vmax.f32 %v530, 0.0
        %v639 = vmax.f32 %v617, 0.0
        %v640 = vmax.f32 %v619, 0.0
        %v641 = vmax.f32 %v534, 0.0
        %v642 = vmax.f32 %v536, 0.0
        %v643 = vmax.f32 %v623, 0.0
        %v644 = vmax.f32 %v625, 0.0
        %v645 = vmax.f32 %v540, 0.0
        %v646 = vmax.f32 %v542, 0.0
        %v647 = vmax.f32 %v629, 0.0
        %v648 = vmax.f32 %v631, 0.0
        %v649 = vld [vmem:[%s2] sm:$0xff]
        %v650 = vld [vmem:[%s2 + $0x8] sm:$0xff]
        %v651 = vld [vmem:[%s2 + $0x10] sm:$0xff]
        %v652 = vld [vmem:[%s2 + $0x18] sm:$0xff]
        %vm653 = vcmask 261120
        %v655 = vsel %vm653, %v649, 0
        %v658 = vsel %vm653, %v650, 0
        %v661 = vsel %vm653, %v651, 0
        %v664 = vsel %vm653, %v652, 0
        %666 = vmatprep.subr.mxu0 %v634
        %667 = vmatpush1.msra.mxu0 %v633
        %668 = vmatprep.subr.mxu0 %v638
        %669 = vmatpush1.msra.mxu0 %v637
        %670 = vmatprep.subr.mxu0 %v642
        %671 = vmatpush1.msra.mxu0 %v641
        %672 = vmatprep.subr.mxu0 %v646
        %673 = vmatpush1.msra.mxu0 %v645
        %674 = vmatprep.subr.mxu0 0.0
        %675 = vmatpush1.msra.mxu0 0.0
        %676 = vmatprep.subr.mxu0 0.0
        %677 = vmatpush1.msra.mxu0 0.0
        %678 = vmatprep.subr.mxu0 0.0
        %679 = vmatpush1.msra.mxu0 0.0
        %680 = vmatprep.subr.mxu0 0.0
        %681 = vmatpush1.msra.mxu0 0.0
        %682 = vmatprep.subr.mxu0 0.0
        %683 = vmatpush1.msra.mxu0 0.0
        %684 = vmatprep.subr.mxu0 0.0
        %685 = vmatpush1.msra.mxu0 0.0
        %686 = vmatprep.subr.mxu0 0.0
        %687 = vmatpush1.msra.mxu0 0.0
        %688 = vmatprep.subr.mxu0 0.0
        %689 = vmatpush1.msra.mxu0 0.0
        %690 = vmatprep.subr.mxu0 0.0
        %691 = vmatpush1.msra.mxu0 0.0
        %692 = vmatprep.subr.mxu0 0.0
        %693 = vmatpush1.msra.mxu0 0.0
        %694 = vmatprep.subr.mxu0 0.0
        %695 = vmatpush1.msra.mxu0 0.0
        %696 = vmatprep.subr.mxu0 0.0
        %697 = vmatpush1.msra.mxu0 0.0
        %698 = vmatprep.subr.mxu0 0.0
        %699 = vmatpush1.msra.mxu0 0.0
        %700 = vmatprep.subr.mxu0 0.0
        %701 = vmatpush1.msra.mxu0 0.0
        %702 = vmatprep.subr.mxu0 0.0
        %703 = vmatpush1.msra.mxu0 0.0
        %704 = vmatprep.subr.mxu0 0.0
        %705 = vmatpush1.msra.mxu0 0.0
        %706 = vmatprep.subr.mxu0 0.0
        %707 = vmatpush1.msra.mxu0 0.0
        %708 = vmatprep.subr.mxu0 0.0
        %709 = vmatpush1.msra.mxu0 0.0
        %710 = vmatprep.subr.mxu0 0.0
        %711 = vmatpush1.msra.mxu0 0.0
        %712 = vmatprep.subr.mxu0 0.0
        %713 = vmatpush1.msra.mxu0 0.0
        %714 = vmatprep.subr.mxu0 0.0
        %715 = vmatpush1.msra.mxu0 0.0
        %716 = vmatprep.subr.mxu0 0.0
        %717 = vmatpush1.msra.mxu0 0.0
        %718 = vmatprep.subr.mxu0 0.0
        %719 = vmatpush1.msra.mxu0 0.0
        %720 = vmatprep.subr.mxu0 0.0
        %721 = vmatpush1.msra.mxu0 0.0
        %722 = vmatprep.subr.mxu0 0.0
        %723 = vmatpush1.msra.mxu0 0.0
        %724 = vmatprep.subr.mxu0 0.0
        %725 = vmatpush1.msra.mxu0 0.0
        %726 = vmatprep.subr.mxu0 0.0
        %727 = vmatpush1.msra.mxu0 0.0
        %728 = vmatprep.subr.mxu0 0.0
        %729 = vmatpush1.msra.mxu0 0.0
        %730 = vmatprep.mubr.f32.mxu0 0.0
        %731 = vmatmul.mubr.f32.gmra.mrb[0].mxu0 %v655
        %v732 = vpop.f32.mrb[0].mxu0
        %v733 = vadd.f32 0.0, %v732
        %v734 = vpop.f32.mrb[0].mxu0
        %v735 = vadd.f32 0.0, %v734
        %736 = vmatprep.mubr.f32.mxu0 0.0
        %737 = vmatmul.mubr.f32.gmra.mrb[0].mxu0 %v658
        %v738 = vpop.f32.mrb[0].mxu0
        %v739 = vadd.f32 0.0, %v738
        %v740 = vpop.f32.mrb[0].mxu0
        %v741 = vadd.f32 0.0, %v740
        %742 = vmatprep.mubr.f32.mxu0 0.0
        %743 = vmatmul.mubr.f32.gmra.mrb[0].mxu0 %v661
        %v744 = vpop.f32.mrb[0].mxu0
        %v745 = vadd.f32 0.0, %v744
        %v746 = vpop.f32.mrb[0].mxu0
        %v747 = vadd.f32 0.0, %v746
        %748 = vmatprep.mubr.f32.mxu0 0.0
        %749 = vmatmul.mubr.f32.gmra.mrb[0].mxu0 %v664
        %v750 = vpop.f32.mrb[0].mxu0
        %v751 = vadd.f32 0.0, %v750
        %v752 = vpop.f32.mrb[0].mxu0
        %v753 = vadd.f32 0.0, %v752
        %754 = vdwg.mxu0
        %755 = vmatprep.subr.mxu0 %v636
        %756 = vmatpush1.msra.mxu0 %v635
        %757 = vmatprep.subr.mxu0 %v640
        %758 = vmatpush1.msra.mxu0 %v639
        %759 = vmatprep.subr.mxu0 %v644
        %760 = vmatpush1.msra.mxu0 %v643
        %761 = vmatprep.subr.mxu0 %v648
        %762 = vmatpush1.msra.mxu0 %v647
        %763 = vmatprep.subr.mxu0 0.0
        %764 = vmatpush1.msra.mxu0 0.0
        %765 = vmatprep.subr.mxu0 0.0
        %766 = vmatpush1.msra.mxu0 0.0
        %767 = vmatprep.subr.mxu0 0.0
        %768 = vmatpush1.msra.mxu0 0.0
        %769 = vmatprep.subr.mxu0 0.0
        %770 = vmatpush1.msra.mxu0 0.0
        %771 = vmatprep.subr.mxu0 0.0
        %772 = vmatpush1.msra.mxu0 0.0
        %773 = vmatprep.subr.mxu0 0.0
        %774 = vmatpush1.msra.mxu0 0.0
        %775 = vmatprep.subr.mxu0 0.0
        %776 = vmatpush1.msra.mxu0 0.0
        %777 = vmatprep.subr.mxu0 0.0
        %778 = vmatpush1.msra.mxu0 0.0
        %779 = vmatprep.subr.mxu0 0.0
        %780 = vmatpush1.msra.mxu0 0.0
        %781 = vmatprep.subr.mxu0 0.0
        %782 = vmatpush1.msra.mxu0 0.0
        %783 = vmatprep.subr.mxu0 0.0
        %784 = vmatpush1.msra.mxu0 0.0
        %785 = vmatprep.subr.mxu0 0.0
        %786 = vmatpush1.msra.mxu0 0.0
        %787 = vmatprep.subr.mxu0 0.0
        %788 = vmatpush1.msra.mxu0 0.0
        %789 = vmatprep.subr.mxu0 0.0
        %790 = vmatpush1.msra.mxu0 0.0
        %791 = vmatprep.subr.mxu0 0.0
        %792 = vmatpush1.msra.mxu0 0.0
        %793 = vmatprep.subr.mxu0 0.0
        %794 = vmatpush1.msra.mxu0 0.0
        %795 = vmatprep.subr.mxu0 0.0
        %796 = vmatpush1.msra.mxu0 0.0
        %797 = vmatprep.subr.mxu0 0.0
        %798 = vmatpush1.msra.mxu0 0.0
        %799 = vmatprep.subr.mxu0 0.0
        %800 = vmatpush1.msra.mxu0 0.0
        %801 = vmatprep.subr.mxu0 0.0
        %802 = vmatpush1.msra.mxu0 0.0
        %803 = vmatprep.subr.mxu0 0.0
        %804 = vmatpush1.msra.mxu0 0.0
        %805 = vmatprep.subr.mxu0 0.0
        %806 = vmatpush1.msra.mxu0 0.0
        %807 = vmatprep.subr.mxu0 0.0
        %808 = vmatpush1.msra.mxu0 0.0
        %809 = vmatprep.subr.mxu0 0.0
        %810 = vmatpush1.msra.mxu0 0.0
        %811 = vmatprep.subr.mxu0 0.0
        %812 = vmatpush1.msra.mxu0 0.0
        %813 = vmatprep.subr.mxu0 0.0
        %814 = vmatpush1.msra.mxu0 0.0
        %815 = vmatprep.subr.mxu0 0.0
        %816 = vmatpush1.msra.mxu0 0.0
        %817 = vmatprep.subr.mxu0 0.0
        %818 = vmatpush1.msra.mxu0 0.0
        %819 = vmatprep.mubr.f32.mxu0 0.0
        %820 = vmatmul.mubr.f32.gmra.mrb[0].mxu0 %v655
        %v821 = vpop.f32.mrb[0].mxu0
        %v822 = vadd.f32 0.0, %v821
        %v823 = vpop.f32.mrb[0].mxu0
        %v824 = vadd.f32 0.0, %v823
        %825 = vmatprep.mubr.f32.mxu0 0.0
        %826 = vmatmul.mubr.f32.gmra.mrb[0].mxu0 %v658
        %v827 = vpop.f32.mrb[0].mxu0
        %v828 = vadd.f32 0.0, %v827
        %v829 = vpop.f32.mrb[0].mxu0
        %v830 = vadd.f32 0.0, %v829
        %831 = vmatprep.mubr.f32.mxu0 0.0
        %832 = vmatmul.mubr.f32.gmra.mrb[0].mxu0 %v661
        %v833 = vpop.f32.mrb[0].mxu0
        %v834 = vadd.f32 0.0, %v833
        %v835 = vpop.f32.mrb[0].mxu0
        %v836 = vadd.f32 0.0, %v835
        %837 = vmatprep.mubr.f32.mxu0 0.0
        %838 = vmatmul.mubr.f32.gmra.mrb[0].mxu0 %v664
        %v839 = vpop.f32.mrb[0].mxu0
        %v840 = vadd.f32 0.0, %v839
        %v841 = vpop.f32.mrb[0].mxu0
        %v842 = vadd.f32 0.0, %v841
        %843 = vdwg.mxu0
        %v844 = vmax.f32 %v733, 0.0
        %v845 = vmax.f32 %v735, 0.0
        %v846 = vmax.f32 %v822, 0.0
        %v847 = vmax.f32 %v824, 0.0
        %v848 = vmax.f32 %v739, 0.0
        %v849 = vmax.f32 %v741, 0.0
        %v850 = vmax.f32 %v828, 0.0
        %v851 = vmax.f32 %v830, 0.0
        %v852 = vmax.f32 %v745, 0.0
        %v853 = vmax.f32 %v747, 0.0
        %v854 = vmax.f32 %v834, 0.0
        %v855 = vmax.f32 %v836, 0.0
        %v856 = vmax.f32 %v751, 0.0
        %v857 = vmax.f32 %v753, 0.0
        %v858 = vmax.f32 %v840, 0.0
        %v859 = vmax.f32 %v842, 0.0
        %860 = vst [vmem:[%s162] sm:$0xff] %v844
        %861 = vst [vmem:[%s162 + $0x8] sm:$0xff] %v845
        %862 = vst [vmem:[%s162 + $0x10] sm:$0xff] %v846
        %863 = vst [vmem:[%s162 + $0x18] sm:$0xff] %v847
        %864 = vst [vmem:[%s162 + $0x20] sm:$0xff] %v848
        %865 = vst [vmem:[%s162 + $0x28] sm:$0xff] %v849
        %866 = vst [vmem:[%s162 + $0x30] sm:$0xff] %v850
        %867 = vst [vmem:[%s162 + $0x38] sm:$0xff] %v851
        %868 = vst [vmem:[%s162 + $0x40] sm:$0xff] %v852
        %869 = vst [vmem:[%s162 + $0x48] sm:$0xff] %v853
        %870 = vst [vmem:[%s162 + $0x50] sm:$0xff] %v854
        %871 = vst [vmem:[%s162 + $0x58] sm:$0xff] %v855
        %872 = vst [vmem:[%s162 + $0x60] sm:$0xff] %v856
        %873 = vst [vmem:[%s162 + $0x68] sm:$0xff] %v857
        %874 = vst [vmem:[%s162 + $0x70] sm:$0xff] %v858
        %875 = vst [vmem:[%s162 + $0x78] sm:$0xff] %v859
        %s876 = sand.u32 %s93, 1
        %s877 = scalar_lea.sflag [#allocation4], %s876
        %s878 = sand.u32 %s93, 1
        %s879 = smul.addr %s878, 128
        %s880 = scalar_lea.vmem [#allocation3], %s879
        // Predicated region
        $region33: #{tpu_custom_call.1} parent=31 // pred_check
          %p881 = pneg %p103
        $region34: #{tpu_custom_call.1} parent=31 // pred_check_branch
          %883 = sbr.rel (%p881) target = $region36
        $region35: #{tpu_custom_call.1} parent=31 // pred_region
          %s884 = smul.u32 4, %s17
          %s886 = ssub.s32 2048, 2048
          %887 = vsyncadd %s877, %s886
          %s888 = smul.addr %s884, 128
          %s889 = scalar_lea.hbm %s3, %s888
          %s890 = sshll.u32 %s880, 4
          %s891 = int_to_ptr.vmem [resolvable:$true] %s890
          %896 = dma.vmem_to_hbm [thread:$0]  %s891, 2048, %s889, %s877, 512, 1024, 32
        $region36: #{tpu_custom_call.1} parent=31 // pred_fallthru
          _
      $region32: #{tpu_custom_call.1} parent=5 // pred_fallthru
        _
      %p897 = scmp.le.s32.totalorder 2, %s12
      // Predicated region
      $region37: #{tpu_custom_call.1} parent=5 // pred_check
        %p898 = pneg %p897
      $region38: #{tpu_custom_call.1} parent=5 // pred_check_branch
        %900 = sbr.rel (%p898) target = $region40
      $region39: #{tpu_custom_call.1} parent=5 // pred_region
        %s901 = ssub.s32 %s12, 2
        // Predicated region
        $region41: #{tpu_custom_call.1} parent=39 // pred_check
          %p902 = pneg %p109
        $region42: #{tpu_custom_call.1} parent=39 // pred_check_branch
          %904 = sbr.rel (%p902) target = $region44
        $region43: #{tpu_custom_call.1} parent=39 // pred_region
          %s905 = sand.u32 %s94, 1
          %s906 = scalar_lea.sflag [#allocation4], %s905
          %s907 = sand.u32 %s94, 1
          %s908 = smul.addr %s907, 128
          %s909 = scalar_lea.vmem [#allocation3], %s908
          %910 = dma.done %s906, 2048
        $region44: #{tpu_custom_call.1} parent=39 // pred_fallthru
          _
      $region40: #{tpu_custom_call.1} parent=5 // pred_fallthru
        _
    $region6: #{tpu_custom_call.1} parent=1 // loop_footer
      %s16 = sadd.s32 1, %s12
    $region7: #{tpu_custom_call.1} parent=1 // loop_footer_branch
      %11 = sbr.rel target = $region3
    $region8: #{tpu_custom_call.1} parent=1 // loop_exit
      _
    %911 = vsyncpa [#allocation4], 1
    %s912 = scalar_lea.sflag [#allocation4], 1
    %913 = vsyncpa %s912, 1

</llo_original>
